<compile_context>
chip_gen: v7x
topology: tpu7x:2x2x1
jax: 0.10.0
libtpu: 0.0.40
codegen_flags: <defaults>
</compile_context>

<pallas_src>
import jax
import jax.numpy as jnp
from jax import lax
from jax.experimental import pallas as pl
from jax.experimental.pallas import tpu as pltpu


LANE = 128
_SINGLE_BUFFER_W_BYTES = 4 << 20     # single-buffer the resident weight past this size
_VMEM_CAP_BYTES = 48 << 20           # safe on v7x (64 MiB/TC) and v5e/v6e (128 MiB)


def _round_up(x, m):
    return ((int(x) + m - 1) // m) * m


def skip_linear_kernel(x_ref, w_ref, b_ref, o_ref):
    # y = x @ W^T + b  (bf16 MXU matmul, f32 accumulation);  out = x + y (f32).
    # w_ref already holds W^T ([H_in, H_out], bf16) so the contraction is on
    # the RHS's leading dim -- no per-step transpose of the resident weight.
    x = x_ref[...]                                   # [tile_n, H], input dtype
    y = lax.dot_general(
        x.astype(jnp.bfloat16),
        w_ref[...],                                  # bf16 [H_in, H_out]
        dimension_numbers=(((1,), (0,)), ((), ())),
        preferred_element_type=jnp.float32,
    )
    # Single fused epilogue store (one vst stream: matters on v5e's 1 store slot).
    o_ref[...] = (x.astype(jnp.float32) + y + b_ref[...]).astype(o_ref.dtype)


def prepare_skip_linear_params(weight, bias):
    """One-time parameter prep (hoisted out of the hot path).

    weight: [H_out, H_in] (PyTorch convention), bias: [H_out].
    Returns (W^T as bf16 [H_in, H_out], bias as f32 [1, H_out]).
    """
    H_out, H_in = weight.shape
    assert H_out == H_in, "skip connection requires module(x) to keep the hidden dim"
    w_t = jnp.asarray(weight).T.astype(jnp.bfloat16)
    b_row = jnp.asarray(bias).reshape(1, H_out).astype(jnp.float32)
    return w_t, b_row


def skip_connection_linear(x, w_t, b_row, *, tile_n=1024):
    """x: [N, H];  w_t: bf16 [H, H] (= W^T);  b_row: f32 [1, H]."""
    N, H = x.shape
    assert w_t.shape == (H, H) and b_row.shape == (1, H)

    itemsize = jnp.dtype(x.dtype).itemsize
    w_bytes = H * H * jnp.dtype(w_t.dtype).itemsize
    b_bytes = H * jnp.dtype(b_row.dtype).itemsize

    # Single-buffer the resident weight only when it is big enough to matter
    # (its index_map is constant, so one buffer suffices).
    single_buffer_w = w_bytes >= _SINGLE_BUFFER_W_BYTES
    w_buffers = 1 if single_buffer_w else 2

    # VMEM-aware tile cap: 2 pipelined buffers each for the x tile and out tile.
    avail = _VMEM_CAP_BYTES - w_buffers * w_bytes - 2 * b_bytes - (1 << 20)
    assert avail > 0, "weight does not fit resident in VMEM; needs a K/N-tiled variant"
    max_tile = max(LANE, ((avail // (4 * H * itemsize)) // LANE) * LANE)

    # Aim for >= 4 grid steps (v7x: 2 TCs x >= 2 pipelined steps each); 128-multiple rows.
    tile_cap = max(LANE, _round_up(pl.cdiv(N, 4), LANE))
    tile_n = max(LANE, _round_up(min(int(tile_n), tile_cap), LANE))
    tile_n = min(tile_n, max_tile)
    n_tiles = pl.cdiv(N, tile_n)            # ragged last block is masked by Pallas

    need = 4 * tile_n * H * itemsize + w_buffers * w_bytes + 2 * b_bytes + (1 << 20)
    vmem_budget = int(min(max(need, 16 << 20), _VMEM_CAP_BYTES))

    if single_buffer_w:
        w_spec = pl.BlockSpec((H, H), lambda i: (0, 0), pipeline_mode=pl.Buffered(1))
    else:
        w_spec = pl.BlockSpec((H, H), lambda i: (0, 0))

    cost = pl.CostEstimate(
        flops=2 * N * H * H,
        transcendentals=0,
        bytes_accessed=2 * N * H * itemsize + w_bytes + b_bytes,
    )

    return pl.pallas_call(
        skip_linear_kernel,
        out_shape=jax.ShapeDtypeStruct((N, H), x.dtype),
        grid_spec=pltpu.PrefetchScalarGridSpec(
            num_scalar_prefetch=0,
            grid=(n_tiles,),
            in_specs=[
                pl.BlockSpec((tile_n, H), lambda i: (i, 0)),   # x row tile (pipelined)
                w_spec,                                        # resident bf16 W^T
                pl.BlockSpec((1, H), lambda i: (0, 0)),        # resident bias
            ],
            out_specs=pl.BlockSpec((tile_n, H), lambda i: (i, 0)),
        ),
        compiler_params=pltpu.CompilerParams(
            dimension_semantics=("parallel",),   # rows independent -> megacore shardable
            vmem_limit_bytes=vmem_budget,
        ),
        cost_estimate=cost,
    )(x, w_t, b_row)


def skip_connection_ref_f32(x, weight, bias):
    return x + (x @ weight.T + bias[None, :])


def skip_connection_ref_bf16(x, w_t, b_row):
    # Mirrors the kernel's precision: bf16 operands, f32 accumulation/residual.
    y = lax.dot_general(
        x.astype(jnp.bfloat16), w_t,
        dimension_numbers=(((1,), (0,)), ((), ())),
        preferred_element_type=jnp.float32,
    )
    return (x.astype(jnp.float32) + y + b_row).astype(x.dtype)


if __name__ == "__main__":
    key = jax.random.PRNGKey(0)
    k_x, k_w, k_b = jax.random.split(key, 3)

    # Small but ragged node count (exercises the masked ragged last block and a
    # multi-step grid), hidden=32 as in the gnngls encoder demo.
    N, H = 300, 32
    x = jax.random.normal(k_x, (N, H), dtype=jnp.float32)
    weight = jax.random.normal(k_w, (H, H), dtype=jnp.float32) * (1.0 / jnp.sqrt(H))
    bias = jax.random.normal(k_b, (H,), dtype=jnp.float32) * 0.1

    # Parameter prep is done once, outside the hot path.
    w_t, b_row = prepare_skip_linear_params(weight, bias)

    out = skip_connection_linear(x, w_t, b_row)
    out = jax.block_until_ready(out)
    assert out.shape == (N, H)

    # Tight check vs a reference with matching (bf16-matmul, f32-acc) precision.
    ref_bf16 = skip_connection_ref_bf16(x, w_t, b_row)
    assert jnp.allclose(out, ref_bf16, atol=1e-4, rtol=1e-4), "mismatch vs bf16-precision reference"

    # Loose sanity check vs the pure-f32 PyTorch-equivalent math.
    ref_f32 = skip_connection_ref_f32(x, weight, bias)
    assert jnp.allclose(out, ref_f32, atol=5e-2, rtol=5e-2), "mismatch vs f32 reference"

    print("KERNEL_OK")
</pallas_src>

<mosaic_0001>
module attributes {stable_mosaic.version = 11 : i64} {
  func.func @skip_linear_kernel(%arg0: i32, %arg1: memref<128x32xf32, #tpu.memory_space<vmem>>, %arg2: memref<32x32xbf16, #tpu.memory_space<vmem>>, %arg3: memref<1x32xf32, #tpu.memory_space<vmem>>, %arg4: memref<128x32xf32, #tpu.memory_space<vmem>>) attributes {dimension_semantics = [#tpu.dimension_semantics<parallel>], iteration_bounds = array<i64: 3>, scalar_prefetch = 0 : i64, scratch_operands = 0 : i64, tpu.core_type = #tpu.core_type<tc>, window_params = [{transform_indices = @transform_0, window_bounds = array<i64: 128, 32>}, {pipeline_mode = #tpu.pipeline_mode<synchronous>, transform_indices = @transform_1, window_bounds = array<i64: 32, 32>}, {pipeline_mode = #tpu.pipeline_mode<synchronous>, transform_indices = @transform_2, window_bounds = array<i64: 1, 32>}, {transform_indices = @transform_3, window_bounds = array<i64: 128, 32>}]} {
    %c0 = arith.constant 0 : index
    %c0_0 = arith.constant 0 : index
    %0 = vector.load %arg1[%c0, %c0_0] : memref<128x32xf32, #tpu.memory_space<vmem>>, vector<128x32xf32>
    %1 = arith.truncf %0 : vector<128x32xf32> to vector<128x32xbf16>
    %c0_1 = arith.constant 0 : index
    %c0_2 = arith.constant 0 : index
    %2 = vector.load %arg2[%c0_1, %c0_2] : memref<32x32xbf16, #tpu.memory_space<vmem>>, vector<32x32xbf16>
    %cst = arith.constant dense<0.000000e+00> : vector<128x32xf32>
    %3 = tpu.matmul %1, %2, %cst {dimension_numbers = #tpu.dot_dimension_numbers<[1], [0], [0], [1], [0, 0, 1, 1], [], []>} : vector<128x32xbf16>, vector<32x32xbf16>, vector<128x32xf32> -> vector<128x32xf32>
    %4 = arith.addf %0, %3 : vector<128x32xf32>
    %c0_3 = arith.constant 0 : index
    %c0_4 = arith.constant 0 : index
    %5 = vector.load %arg3[%c0_3, %c0_4] : memref<1x32xf32, #tpu.memory_space<vmem>>, vector<1x32xf32>
    %6 = vector.broadcast %5 : vector<1x32xf32> to vector<128x32xf32>
    %7 = arith.addf %4, %6 : vector<128x32xf32>
    %c0_5 = arith.constant 0 : index
    %c0_6 = arith.constant 0 : index
    %8 = vector.load %arg4[%c0_5, %c0_6] : memref<128x32xf32, #tpu.memory_space<vmem>>, vector<128x32xf32>
    tpu.vector_store %arg4[%c0_5, %c0_6], %7 {strides = array<i32>} : memref<128x32xf32, #tpu.memory_space<vmem>>, vector<128x32xf32>,
    return
  }
  func.func @transform_0(%arg0: i32) -> (i32, i32) {
    %c0_i32 = arith.constant 0 : i32
    %c0_i32_0 = arith.constant 0 : i32
    return %arg0, %c0_i32 : i32, i32
  }
  func.func @transform_1(%arg0: i32) -> (i32, i32) {
    %c0_i32 = arith.constant 0 : i32
    %c0_i32_0 = arith.constant 0 : i32
    %c0_i32_1 = arith.constant 0 : i32
    return %c0_i32, %c0_i32_0 : i32, i32
  }
  func.func @transform_2(%arg0: i32) -> (i32, i32) {
    %c0_i32 = arith.constant 0 : i32
    %c0_i32_0 = arith.constant 0 : i32
    %c0_i32_1 = arith.constant 0 : i32
    return %c0_i32, %c0_i32_0 : i32, i32
  }
  func.func @transform_3(%arg0: i32) -> (i32, i32) {
    %c0_i32 = arith.constant 0 : i32
    %c0_i32_0 = arith.constant 0 : i32
    return %arg0, %c0_i32 : i32, i32
  }
}

</mosaic_0001>

<llo_original>
// kernel: tpu_custom_call.1
$region0: #{tpu_custom_call.1}
  #allocation0 [shape = 'u32[]', space=smem, size = 0x4, offset = 0x4, fixed_abs, tag = 'smem constant byte address 0x4 - core index']
  #allocation1 [shape = 'u32[144,128]{1,0:T(1,128)}', space=vmem, size = 0x12000, scoped, tag = 'internal scratch']
  %s0 = inlined_call_operand.vmem [shape: f32[300,32], index: 0, kind: input, shape index: {}]
  %s1 = inlined_call_operand.vmem [shape: bf16[32,32], index: 1, kind: input, shape index: {}]
  %s2 = inlined_call_operand.vmem [shape: f32[1,32], index: 2, kind: input, shape index: {}]
  %s3 = inlined_call_operand.vmem [shape: f32[300,32], index: 3, kind: output, shape index: {}]
  %s4 = sld [smem:[#allocation0]]
  $region93: #{tpu_custom_call.1} parent=0
    _
  %s6 = ssub.s32 1, %s4
  %s7 = scalar_select 0, %s6, %s4
  $region1: #{tpu_custom_call.1} parent=0
    #allocation2 [shape = 'u8[131072]{0}', space=vmem, size = 0x20000, scoped, tag = 'output window, operand 0']
    loop: start=0, step=1, limit=5
    $region2: #{tpu_custom_call.1} parent=1 // loop_pre_header
      _
    $region3: #{tpu_custom_call.1} parent=1 // loop_header
      %s9 = sphi 0, %s13
      %p10 = scmp.ge.s32.totalorder %s9, 5
      %s19 = sphi 0, %s21
      %s22 = sphi 0, %s19
      %s23 = sphi 0, %s22
      %s39 = sphi 0, %s23
      %s43 = sphi 0, %s43
      %s45 = sphi 0, %s43
      %s46 = sphi 0, %s45
      %s60 = sphi 0, %s46
      %s64 = sphi 0, %s64
      %s66 = sphi 0, %s64
      %s67 = sphi 0, %s66
      %s81 = sphi 0, %s67
      %s87 = sphi 0, %s89
      %s90 = sphi 0, %s87
      %s91 = sphi 0, %s90
      %s107 = sphi 0, %s91
    $region4: #{tpu_custom_call.1} parent=1 // loop_header_branch
      %12 = sbr.rel (%p10) target = $region8
    $region5: #{tpu_custom_call.1} parent=1 // loop_body
      %s14 = ssub.s32 %s9, 1
      %s15 = ssub.s32 %s9, 2
      %s16 = sadd.s32 %s9, 1
      %s17 = ssub.s32 %s9, %s16
      %p18 = scmp.eq.s32.totalorder %s17, 0
      %s20 = sadd.s32 %s19, 1
      %s21 = scalar_select %p18, %s19, %s20
      %p24 = pneg %p18
      %p25 = scmp.eq.s32.totalorder %s9, 2
      %p26 = por %p24, %p25
      %p27 = scmp.ne.s32.totalorder %s19, %s22
      %p28 = scmp.eq.s32.totalorder %s9, 0
      %p29 = por %p27, %p28
      %p30 = scmp.ne.s32.totalorder %s19, %s22
      %p31 = scmp.eq.s32.totalorder %s14, 2
      %p32 = por %p30, %p31
      %p33 = scmp.ne.s32.totalorder %s22, %s23
      %p34 = scmp.eq.s32.totalorder %s14, 0
      %p35 = por %p33, %p34
      %p36 = scmp.ne.s32.totalorder %s22, %s23
      %p37 = scmp.eq.s32.totalorder %s15, 2
      %p38 = por %p36, %p37
      %p40 = scmp.ne.s32.totalorder %s23, %s39
      %p41 = scmp.eq.s32.totalorder %s15, 0
      %p42 = por %p40, %p41
      %s44 = sadd.s32 %s43, 1
      %p47 = scmp.eq.s32.totalorder %s9, 2
      %p48 = scmp.ne.s32.totalorder %s43, %s45
      %p49 = scmp.eq.s32.totalorder %s9, 0
      %p50 = por %p48, %p49
      %p51 = scmp.ne.s32.totalorder %s43, %s45
      %p52 = scmp.eq.s32.totalorder %s14, 2
      %p53 = por %p51, %p52
      %p54 = scmp.ne.s32.totalorder %s45, %s46
      %p55 = scmp.eq.s32.totalorder %s14, 0
      %p56 = por %p54, %p55
      %p57 = scmp.ne.s32.totalorder %s45, %s46
      %p58 = scmp.eq.s32.totalorder %s15, 2
      %p59 = por %p57, %p58
      %p61 = scmp.ne.s32.totalorder %s46, %s60
      %p62 = scmp.eq.s32.totalorder %s15, 0
      %p63 = por %p61, %p62
      %s65 = sadd.s32 %s64, 1
      %p68 = scmp.eq.s32.totalorder %s9, 2
      %p69 = scmp.ne.s32.totalorder %s64, %s66
      %p70 = scmp.eq.s32.totalorder %s9, 0
      %p71 = por %p69, %p70
      %p72 = scmp.ne.s32.totalorder %s64, %s66
      %p73 = scmp.eq.s32.totalorder %s14, 2
      %p74 = por %p72, %p73
      %p75 = scmp.ne.s32.totalorder %s66, %s67
      %p76 = scmp.eq.s32.totalorder %s14, 0
      %p77 = por %p75, %p76
      %p78 = scmp.ne.s32.totalorder %s66, %s67
      %p79 = scmp.eq.s32.totalorder %s15, 2
      %p80 = por %p78, %p79
      %p82 = scmp.ne.s32.totalorder %s67, %s81
      %p83 = scmp.eq.s32.totalorder %s15, 0
      %p84 = por %p82, %p83
      %s85 = ssub.s32 %s9, %s16
      %p86 = scmp.eq.s32.totalorder %s85, 0
      %s88 = sadd.s32 %s87, 1
      %s89 = scalar_select %p86, %s87, %s88
      %p92 = pneg %p86
      %p93 = scmp.eq.s32.totalorder %s9, 2
      %p94 = por %p92, %p93
      %p95 = scmp.ne.s32.totalorder %s87, %s90
      %p96 = scmp.eq.s32.totalorder %s9, 0
      %p97 = por %p95, %p96
      %p98 = scmp.ne.s32.totalorder %s87, %s90
      %p99 = scmp.eq.s32.totalorder %s14, 2
      %p100 = por %p98, %p99
      %p101 = scmp.ne.s32.totalorder %s90, %s91
      %p102 = scmp.eq.s32.totalorder %s14, 0
      %p103 = por %p101, %p102
      %p104 = scmp.ne.s32.totalorder %s90, %s91
      %p105 = scmp.eq.s32.totalorder %s15, 2
      %p106 = por %p104, %p105
      %p108 = scmp.ne.s32.totalorder %s91, %s107
      %p109 = scmp.eq.s32.totalorder %s15, 0
      %p110 = por %p108, %p109
      %p111 = scmp.le.s32.totalorder 1, %s9
      %p112 = scmp.lt.s32.totalorder %s9, 4
      %p113 = pnand %p111, %p112
      %p114 = pneg %p113
      // Predicated region
      $region9: #{tpu_custom_call.1} parent=5 // pred_check
        _
      $region10: #{tpu_custom_call.1} parent=5 // pred_check_branch
        %116 = sbr.rel (%p113) target = $region12
      $region11: #{tpu_custom_call.1} parent=5 // pred_region
        %s117 = ssub.s32 %s9, 1
        // Predicated region
        $region13: #{tpu_custom_call.1} parent=11 // pred_check
          %p118 = pneg %p56
        $region14: #{tpu_custom_call.1} parent=11 // pred_check_branch
          %120 = sbr.rel (%p118) target = $region16
        $region15: #{tpu_custom_call.1} parent=11 // pred_region
          _
        $region16: #{tpu_custom_call.1} parent=11 // pred_fallthru
          _
        // Predicated region
        $region17: #{tpu_custom_call.1} parent=11 // pred_check
          %p121 = pneg %p77
        $region18: #{tpu_custom_call.1} parent=11 // pred_check_branch
          %123 = sbr.rel (%p121) target = $region20
        $region19: #{tpu_custom_call.1} parent=11 // pred_region
          _
        $region20: #{tpu_custom_call.1} parent=11 // pred_fallthru
          _
      $region12: #{tpu_custom_call.1} parent=5 // pred_fallthru
        _
      %p124 = scmp.lt.s32.totalorder %s9, 3
      // Predicated region
      $region21: #{tpu_custom_call.1} parent=5 // pred_check
        %p125 = pneg %p124
      $region22: #{tpu_custom_call.1} parent=5 // pred_check_branch
        %127 = sbr.rel (%p125) target = $region24
      $region23: #{tpu_custom_call.1} parent=5 // pred_region
        // Predicated region
        $region25: #{tpu_custom_call.1} parent=23 // pred_check
          %p128 = pneg %p29
        $region26: #{tpu_custom_call.1} parent=23 // pred_check_branch
          %130 = sbr.rel (%p128) target = $region28
        $region27: #{tpu_custom_call.1} parent=23 // pred_region
          %s131 = smul.u32 16, %s9
          %s132 = ssub.s32 38, %s131
          %p133 = scmp.lt.s32.totalorder %s132, 16
          %s134 = scalar_select %p133, %s132, 16
          %s135 = smul.u32 128, %s134
          %p136 = scmp.lt.s32.totalorder %s131, 37
          %s137 = scalar_select %p136, %s131, 37
          %s138 = smul.addr %s137, 8
          %s139 = scalar_lea.vmem %s0, %s138
          %s140 = smul.u32 16, %s9
          %s141 = ssub.s32 38, %s140
          %p142 = scmp.lt.s32.totalorder %s141, 16
          %s143 = scalar_select %p142, %s141, 16
          %s144 = smul.u32 128, %s143
        $region28: #{tpu_custom_call.1} parent=23 // pred_fallthru
          _
      $region24: #{tpu_custom_call.1} parent=5 // pred_fallthru
        _
      %p145 = scmp.le.s32.totalorder 1, %s9
      %p146 = scmp.lt.s32.totalorder %s9, 4
      %p147 = pnand %p145, %p146
      %p148 = pneg %p147
      // Predicated region
      $region29: #{tpu_custom_call.1} parent=5 // pred_check
        _
      $region30: #{tpu_custom_call.1} parent=5 // pred_check_branch
        %150 = sbr.rel (%p147) target = $region32
      $region31: #{tpu_custom_call.1} parent=5 // pred_region
        %s151 = ssub.s32 %s9, 1
        %s152 = smul.u32 16, %s14
        %s153 = ssub.s32 38, %s152
        %p154 = scmp.lt.s32.totalorder %s153, 16
        %s155 = scalar_select %p154, %s153, 16
        %s156 = smul.u32 128, %s155
        %p157 = scmp.lt.s32.totalorder %s152, 37
        %s158 = scalar_select %p157, %s152, 37
        %s159 = smul.addr %s158, 8
        %s160 = scalar_lea.vmem %s0, %s159
        %p161 = pneg %p35
        %p162 = pneg %p32
        %p163 = pneg %p56
        %p164 = pneg %p53
        %p165 = pneg %p77
        %p166 = pneg %p74
        %p167 = pneg %p103
        %p168 = pneg %p100
        %s169 = sand.u32 %s90, 1
        %s170 = sand.u32 %s90, 1
        %s171 = smul.addr %s170, 128
        %s172 = scalar_lea.vmem [#allocation2], %s171
        %s173 = smul.u32 16, %s14
        %s174 = ssub.s32 38, %s173
        %p175 = scmp.lt.s32.totalorder %s174, 16
        %s176 = scalar_select %p175, %s174, 16
        %s177 = smul.u32 128, %s176
        %p178 = scmp.lt.s32.totalorder %s173, 37
        %s179 = scalar_select %p178, %s173, 37
        %s180 = smul.addr %s179, 8
        %s181 = scalar_lea.vmem %s0, %s180
        %s182 = smul.u32 16, %s14
        %s183 = ssub.s32 38, %s182
        %p184 = scmp.lt.s32.totalorder %s183, 16
        %s185 = scalar_select %p184, %s183, 16
        %s186 = smul.u32 128, %s185
        %s187 = smul.u32 16, %s14
        %s188 = ssub.s32 38, %s187
        %p189 = scmp.lt.s32.totalorder %s188, 16
        %s190 = scalar_select %p189, %s188, 16
        %s191 = smul.u32 128, %s190
        %v193 = vld [vmem:[%s181] sm:$0xff]
        %v194 = vld [vmem:[%s181 + $0x8] sm:$0xff]
        %v195 = vld [vmem:[%s181 + $0x10] sm:$0xff]
        %v196 = vld [vmem:[%s181 + $0x18] sm:$0xff]
        %v197 = vld [vmem:[%s181 + $0x20] sm:$0xff]
        %v198 = vld [vmem:[%s181 + $0x28] sm:$0xff]
        %v199 = vld [vmem:[%s181 + $0x30] sm:$0xff]
        %v200 = vld [vmem:[%s181 + $0x38] sm:$0xff]
        %v201 = vld [vmem:[%s181 + $0x40] sm:$0xff]
        %v202 = vld [vmem:[%s181 + $0x48] sm:$0xff]
        %v203 = vld [vmem:[%s181 + $0x50] sm:$0xff]
        %v204 = vld [vmem:[%s181 + $0x58] sm:$0xff]
        %v205 = vld [vmem:[%s181 + $0x60] sm:$0xff]
        %v206 = vld [vmem:[%s181 + $0x68] sm:$0xff]
        %v207 = vld [vmem:[%s181 + $0x70] sm:$0xff]
        %v208 = vld [vmem:[%s181 + $0x78] sm:$0xff]
        %v209 = vpack.c.bf16 %v194, %v193
        %v210 = vpack.c.bf16 %v196, %v195
        %v211 = vpack.c.bf16 %v198, %v197
        %v212 = vpack.c.bf16 %v200, %v199
        %v213 = vpack.c.bf16 %v202, %v201
        %v214 = vpack.c.bf16 %v204, %v203
        %v215 = vpack.c.bf16 %v206, %v205
        %v216 = vpack.c.bf16 %v208, %v207
        %v217 = vld [vmem:[%s1] sm:$0xf]
        %v218 = vld [vmem:[%s1 + $0x4] sm:$0xf]
        %v219 = vld [vmem:[%s1 + $0x8] sm:$0xf]
        %v220 = vld [vmem:[%s1 + $0xc] sm:$0xf]
        %v225 = vunpack.c.l.b16 %v217
        %v226 = vunpack.c.l.b16 %v218
        %v227 = vunpack.c.l.b16 %v219
        %v228 = vunpack.c.l.b16 %v220
        %v229 = vpack.c.b16 %v226, %v225
        %v230 = vpack.c.b16 %v228, %v227
        %vm233 = vcmask 261120
        %v235 = vsel %vm233, %v209, 0
        %v238 = vsel %vm233, %v210, 0
        %v241 = vsel %vm233, %v211, 0
        %v244 = vsel %vm233, %v212, 0
        %v247 = vsel %vm233, %v213, 0
        %v250 = vsel %vm233, %v214, 0
        %v253 = vsel %vm233, %v215, 0
        %v256 = vsel %vm233, %v216, 0
        %258 = vmatprep.subr.bf16.mxu0 0
        %259 = vmatpush1.bf16.msra.mxu0 %v229
        %260 = vmatprep.subr.bf16.mxu0 0
        %261 = vmatpush1.bf16.msra.mxu0 %v230
        %262 = vmatprep.subr.bf16.mxu0 0
        %263 = vmatpush1.bf16.msra.mxu0 0
        %264 = vmatprep.subr.bf16.mxu0 0
        %265 = vmatpush1.bf16.msra.mxu0 0
        %266 = vmatprep.subr.bf16.mxu0 0
        %267 = vmatpush1.bf16.msra.mxu0 0
        %268 = vmatprep.subr.bf16.mxu0 0
        %269 = vmatpush1.bf16.msra.mxu0 0
        %270 = vmatprep.subr.bf16.mxu0 0
        %271 = vmatpush1.bf16.msra.mxu0 0
        %272 = vmatprep.subr.bf16.mxu0 0
        %273 = vmatpush1.bf16.msra.mxu0 0
        %274 = vmatprep.subr.bf16.mxu0 0
        %275 = vmatpush1.bf16.msra.mxu0 0
        %276 = vmatprep.subr.bf16.mxu0 0
        %277 = vmatpush1.bf16.msra.mxu0 0
        %278 = vmatprep.subr.bf16.mxu0 0
        %279 = vmatpush1.bf16.msra.mxu0 0
        %280 = vmatprep.subr.bf16.mxu0 0
        %281 = vmatpush1.bf16.msra.mxu0 0
        %282 = vmatprep.subr.bf16.mxu0 0
        %283 = vmatpush1.bf16.msra.mxu0 0
        %284 = vmatprep.subr.bf16.mxu0 0
        %285 = vmatpush1.bf16.msra.mxu0 0
        %286 = vmatprep.subr.bf16.mxu0 0
        %287 = vmatpush1.bf16.msra.mxu0 0
        %288 = vmatprep.subr.bf16.mxu0 0
        %289 = vmatpush1.bf16.msra.mxu0 0
        %290 = vmatprep.mubr.bf16.mxu0 0
        %291 = vmatmul.mubr.bf16.gmra.mrb[0].mxu0 %v235
        %v292 = vpop.f32.mrb[0].mxu0
        %v293 = vadd.f32 0.0, %v292
        %v294 = vpop.f32.mrb[0].mxu0
        %v295 = vpop.f32.mrb[0].mxu0
        %v296 = vadd.f32 0.0, %v295
        %v297 = vpop.f32.mrb[0].mxu0
        %298 = vmatprep.mubr.bf16.mxu0 0
        %299 = vmatmul.mubr.bf16.gmra.mrb[0].mxu0 %v238
        %v300 = vpop.f32.mrb[0].mxu0
        %v301 = vadd.f32 0.0, %v300
        %v302 = vpop.f32.mrb[0].mxu0
        %v303 = vpop.f32.mrb[0].mxu0
        %v304 = vadd.f32 0.0, %v303
        %v305 = vpop.f32.mrb[0].mxu0
        %306 = vmatprep.mubr.bf16.mxu0 0
        %307 = vmatmul.mubr.bf16.gmra.mrb[0].mxu0 %v241
        %v308 = vpop.f32.mrb[0].mxu0
        %v309 = vadd.f32 0.0, %v308
        %v310 = vpop.f32.mrb[0].mxu0
        %v311 = vpop.f32.mrb[0].mxu0
        %v312 = vadd.f32 0.0, %v311
        %v313 = vpop.f32.mrb[0].mxu0
        %314 = vmatprep.mubr.bf16.mxu0 0
        %315 = vmatmul.mubr.bf16.gmra.mrb[0].mxu0 %v244
        %v316 = vpop.f32.mrb[0].mxu0
        %v317 = vadd.f32 0.0, %v316
        %v318 = vpop.f32.mrb[0].mxu0
        %v319 = vpop.f32.mrb[0].mxu0
        %v320 = vadd.f32 0.0, %v319
        %v321 = vpop.f32.mrb[0].mxu0
        %322 = vmatprep.mubr.bf16.mxu0 0
        %323 = vmatmul.mubr.bf16.gmra.mrb[0].mxu0 %v247
        %v324 = vpop.f32.mrb[0].mxu0
        %v325 = vadd.f32 0.0, %v324
        %v326 = vpop.f32.mrb[0].mxu0
        %v327 = vpop.f32.mrb[0].mxu0
        %v328 = vadd.f32 0.0, %v327
        %v329 = vpop.f32.mrb[0].mxu0
        %330 = vmatprep.mubr.bf16.mxu0 0
        %331 = vmatmul.mubr.bf16.gmra.mrb[0].mxu0 %v250
        %v332 = vpop.f32.mrb[0].mxu0
        %v333 = vadd.f32 0.0, %v332
        %v334 = vpop.f32.mrb[0].mxu0
        %v335 = vpop.f32.mrb[0].mxu0
        %v336 = vadd.f32 0.0, %v335
        %v337 = vpop.f32.mrb[0].mxu0
        %338 = vmatprep.mubr.bf16.mxu0 0
        %339 = vmatmul.mubr.bf16.gmra.mrb[0].mxu0 %v253
        %v340 = vpop.f32.mrb[0].mxu0
        %v341 = vadd.f32 0.0, %v340
        %v342 = vpop.f32.mrb[0].mxu0
        %v343 = vpop.f32.mrb[0].mxu0
        %v344 = vadd.f32 0.0, %v343
        %v345 = vpop.f32.mrb[0].mxu0
        %346 = vmatprep.mubr.bf16.mxu0 0
        %347 = vmatmul.mubr.bf16.gmra.mrb[0].mxu0 %v256
        %v348 = vpop.f32.mrb[0].mxu0
        %v349 = vadd.f32 0.0, %v348
        %v350 = vpop.f32.mrb[0].mxu0
        %v351 = vpop.f32.mrb[0].mxu0
        %v352 = vadd.f32 0.0, %v351
        %v353 = vpop.f32.mrb[0].mxu0
        %354 = vdwg.mxu0
        %v355 = vadd.f32 %v193, %v293
        %v356 = vadd.f32 %v194, %v296
        %v357 = vadd.f32 %v195, %v301
        %v358 = vadd.f32 %v196, %v304
        %v359 = vadd.f32 %v197, %v309
        %v360 = vadd.f32 %v198, %v312
        %v361 = vadd.f32 %v199, %v317
        %v362 = vadd.f32 %v200, %v320
        %v363 = vadd.f32 %v201, %v325
        %v364 = vadd.f32 %v202, %v328
        %v365 = vadd.f32 %v203, %v333
        %v366 = vadd.f32 %v204, %v336
        %v367 = vadd.f32 %v205, %v341
        %v368 = vadd.f32 %v206, %v344
        %v369 = vadd.f32 %v207, %v349
        %v370 = vadd.f32 %v208, %v352
        %v371 = vld [vmem:[%s2] sm:$0x1]
        %v373 = vlaneseq
        %v374 = vshrl.u32 %v373, 7
        %v375 = vsub.s32 0, %v374
        %v376 = vrot.slane %v371, %v375
        %v378 = vadd.f32 %v355, %v376
        %v379 = vadd.f32 %v356, %v376
        %v380 = vadd.f32 %v357, %v376
        %v381 = vadd.f32 %v358, %v376
        %v382 = vadd.f32 %v359, %v376
        %v383 = vadd.f32 %v360, %v376
        %v384 = vadd.f32 %v361, %v376
        %v385 = vadd.f32 %v362, %v376
        %v386 = vadd.f32 %v363, %v376
        %v387 = vadd.f32 %v364, %v376
        %v388 = vadd.f32 %v365, %v376
        %v389 = vadd.f32 %v366, %v376
        %v390 = vadd.f32 %v367, %v376
        %v391 = vadd.f32 %v368, %v376
        %v392 = vadd.f32 %v369, %v376
        %v393 = vadd.f32 %v370, %v376
        %394 = vst.msk [vmem:[%s172] sm:$0xff] %vm233, %v378
        %395 = vst.msk [vmem:[%s172 + $0x8] sm:$0xff] %vm233, %v379
        %396 = vst.msk [vmem:[%s172 + $0x10] sm:$0xff] %vm233, %v380
        %397 = vst.msk [vmem:[%s172 + $0x18] sm:$0xff] %vm233, %v381
        %398 = vst.msk [vmem:[%s172 + $0x20] sm:$0xff] %vm233, %v382
        %399 = vst.msk [vmem:[%s172 + $0x28] sm:$0xff] %vm233, %v383
        %400 = vst.msk [vmem:[%s172 + $0x30] sm:$0xff] %vm233, %v384
        %401 = vst.msk [vmem:[%s172 + $0x38] sm:$0xff] %vm233, %v385
        %402 = vst.msk [vmem:[%s172 + $0x40] sm:$0xff] %vm233, %v386
        %403 = vst.msk [vmem:[%s172 + $0x48] sm:$0xff] %vm233, %v387
        %404 = vst.msk [vmem:[%s172 + $0x50] sm:$0xff] %vm233, %v388
        %405 = vst.msk [vmem:[%s172 + $0x58] sm:$0xff] %vm233, %v389
        %406 = vst.msk [vmem:[%s172 + $0x60] sm:$0xff] %vm233, %v390
        %407 = vst.msk [vmem:[%s172 + $0x68] sm:$0xff] %vm233, %v391
        %408 = vst.msk [vmem:[%s172 + $0x70] sm:$0xff] %vm233, %v392
        %409 = vst.msk [vmem:[%s172 + $0x78] sm:$0xff] %vm233, %v393
        %s410 = sand.u32 %s90, 1
        %s411 = sand.u32 %s90, 1
        %s412 = smul.addr %s411, 128
        %s413 = scalar_lea.vmem [#allocation2], %s412
        // Predicated region
        $region33: #{tpu_custom_call.1} parent=31 // pred_check
          %p414 = pneg %p100
        $region34: #{tpu_custom_call.1} parent=31 // pred_check_branch
          %416 = sbr.rel (%p414) target = $region36
        $region35: #{tpu_custom_call.1} parent=31 // pred_region
          %s417 = smul.u32 16, %s14
          %s418 = ssub.s32 38, %s417
          %p419 = scmp.lt.s32.totalorder %s418, 16
          %s420 = scalar_select %p419, %s418, 16
          %s421 = smul.u32 128, %s420
          %p422 = scmp.ne.s32.totalorder 0, %s421
          %s423 = smul.addr %s417, 8
          %s424 = scalar_lea.vmem %s3, %s423
          // Predicated region
          $region37: #{tpu_custom_call.1} parent=35 // pred_check
            %p425 = pneg %p422
          $region38: #{tpu_custom_call.1} parent=35 // pred_check_branch
            %427 = sbr.rel (%p425) target = $region40
          $region39: #{tpu_custom_call.1} parent=35 // pred_region
            // Predicated region
            $region41: #{tpu_custom_call.1} parent=39 // pred_check
              _
            $region42: #{tpu_custom_call.1} parent=39 // pred_check_branch
              %429 = sbr.rel (0) target = $region44
            $region43: #{tpu_custom_call.1} parent=39 // pred_region
              // Predicated region
              $region63: #{tpu_custom_call.1} parent=43 // pred_check
                _
              $region64: #{tpu_custom_call.1} parent=43 // pred_check_branch
                %508 = sbr.rel (0) target = $region66
              $region65: #{tpu_custom_call.1} parent=43 // pred_region
                %s509 = sshrl.u32 %s420, 4
                // While loop
                $region67: #{tpu_custom_call.1} parent=65 // loop_pre_header
                  _
                $region68: #{tpu_custom_call.1} parent=65 // loop_header
                  %s511 = sphi 0, %s513
                  %p512 = scmp.ge.s32.totalorder %s511, %s509
                  %s516 = sphi 0, %s553
                  %s517 = sphi %s413, %s556
                  %s518 = sphi %s424, %s557
                $region69: #{tpu_custom_call.1} parent=65 // loop_header_branch
                  %515 = sbr.rel (%p512) target = $region73
                $region70: #{tpu_custom_call.1} parent=65 // loop_body
                  %v519 = vld [vmem:[%s517] sm:$0xff]
                  %520 = vst [vmem:[%s518] sm:$0xff] %v519
                  %v521 = vld [vmem:[%s517 + $0x8] sm:$0xff]
                  %522 = vst [vmem:[%s518 + $0x8] sm:$0xff] %v521
                  %v523 = vld [vmem:[%s517 + $0x10] sm:$0xff]
                  %524 = vst [vmem:[%s518 + $0x10] sm:$0xff] %v523
                  %v525 = vld [vmem:[%s517 + $0x18] sm:$0xff]
                  %526 = vst [vmem:[%s518 + $0x18] sm:$0xff] %v525
                  %v527 = vld [vmem:[%s517 + $0x20] sm:$0xff]
                  %528 = vst [vmem:[%s518 + $0x20] sm:$0xff] %v527
                  %v529 = vld [vmem:[%s517 + $0x28] sm:$0xff]
                  %530 = vst [vmem:[%s518 + $0x28] sm:$0xff] %v529
                  %v531 = vld [vmem:[%s517 + $0x30] sm:$0xff]
                  %532 = vst [vmem:[%s518 + $0x30] sm:$0xff] %v531
                  %v533 = vld [vmem:[%s517 + $0x38] sm:$0xff]
                  %534 = vst [vmem:[%s518 + $0x38] sm:$0xff] %v533
                  %v535 = vld [vmem:[%s517 + $0x40] sm:$0xff]
                  %536 = vst [vmem:[%s518 + $0x40] sm:$0xff] %v535
                  %v537 = vld [vmem:[%s517 + $0x48] sm:$0xff]
                  %538 = vst [vmem:[%s518 + $0x48] sm:$0xff] %v537
                  %v539 = vld [vmem:[%s517 + $0x50] sm:$0xff]
                  %540 = vst [vmem:[%s518 + $0x50] sm:$0xff] %v539
                  %v541 = vld [vmem:[%s517 + $0x58] sm:$0xff]
                  %542 = vst [vmem:[%s518 + $0x58] sm:$0xff] %v541
                  %v543 = vld [vmem:[%s517 + $0x60] sm:$0xff]
                  %544 = vst [vmem:[%s518 + $0x60] sm:$0xff] %v543
                  %v545 = vld [vmem:[%s517 + $0x68] sm:$0xff]
                  %546 = vst [vmem:[%s518 + $0x68] sm:$0xff] %v545
                  %v547 = vld [vmem:[%s517 + $0x70] sm:$0xff]
                  %548 = vst [vmem:[%s518 + $0x70] sm:$0xff] %v547
                  %v549 = vld [vmem:[%s517 + $0x78] sm:$0xff]
                  %550 = vst [vmem:[%s518 + $0x78] sm:$0xff] %v549
                  %s551 = sadd.s32 1, %s516
                  %p552 = scmp.ge.s32.totalorder %s551, %s509
                  %s553 = scalar_select %p552, 0, %s551
                  %s554 = smul.u32 %s553, 128
                  %s555 = smul.u32 %s553, 128
                  %s556 = scalar_lea.vmem %s413, %s554 [#allocation2]
                  %s557 = scalar_lea.vmem %s424, %s555
                $region71: #{tpu_custom_call.1} parent=65 // loop_footer
                  %s513 = sadd.s32 %s511, 1
                $region72: #{tpu_custom_call.1} parent=65 // loop_footer_branch
                  %510 = sbr.rel target = $region68
                $region73: #{tpu_custom_call.1} parent=65 // loop_exit
                  _
                %s558 = sshrl.u32 %s420, 4
                %s559 = sand.u32 %s420, 15
                %s560 = smul.u32 %s558, 16
                %s561 = smul.u32 8, %s560
                %s562 = scalar_lea.vmem %s413, %s561 [#allocation2]
                %s563 = smul.u32 8, %s560
                %s564 = scalar_lea.vmem %s424, %s563
                // While loop
                $region74: #{tpu_custom_call.1} parent=65 // loop_pre_header
                  _
                $region75: #{tpu_custom_call.1} parent=65 // loop_header
                  %s566 = sphi 0, %s568
                  %p567 = scmp.ge.s32.totalorder %s566, %s559
                  %s571 = sphi 0, %s578
                  %s572 = sphi %s562, %s581
                  %s573 = sphi %s564, %s582
                $region76: #{tpu_custom_call.1} parent=65 // loop_header_branch
                  %570 = sbr.rel (%p567) target = $region80
                $region77: #{tpu_custom_call.1} parent=65 // loop_body
                  %v574 = vld [vmem:[%s572] sm:$0xff]
                  %575 = vst [vmem:[%s573] sm:$0xff] %v574
                  %s576 = sadd.s32 1, %s571
                  %p577 = scmp.ge.s32.totalorder %s576, %s559
                  %s578 = scalar_select %p577, 0, %s576
                  %s579 = smul.u32 %s578, 8
                  %s580 = smul.u32 %s578, 8
                  %s581 = scalar_lea.vmem %s562, %s579 [#allocation2]
                  %s582 = scalar_lea.vmem %s564, %s580
                $region78: #{tpu_custom_call.1} parent=65 // loop_footer
                  %s568 = sadd.s32 %s566, 1
                $region79: #{tpu_custom_call.1} parent=65 // loop_footer_branch
                  %565 = sbr.rel target = $region75
                $region80: #{tpu_custom_call.1} parent=65 // loop_exit
                  _
              $region66: #{tpu_custom_call.1} parent=43 // pred_fallthru
                _
              // Predicated region
              $region81: #{tpu_custom_call.1} parent=43 // pred_check
                _
              $region82: #{tpu_custom_call.1} parent=43 // pred_check_branch
                %584 = sbr.rel target = $region84
              $region83: #{tpu_custom_call.1} parent=43 // pred_region
                _
              $region84: #{tpu_custom_call.1} parent=43 // pred_fallthru
                _
            $region44: #{tpu_custom_call.1} parent=39 // pred_fallthru
              _
            // Predicated region
            $region45: #{tpu_custom_call.1} parent=39 // pred_check
              _
            $region46: #{tpu_custom_call.1} parent=39 // pred_check_branch
              %431 = sbr.rel target = $region48
            $region47: #{tpu_custom_call.1} parent=39 // pred_region
              %s433 = sshrl.u32 %s420, 4
              // While loop
              $region49: #{tpu_custom_call.1} parent=47 // loop_pre_header
                _
              $region50: #{tpu_custom_call.1} parent=47 // loop_header
                %s435 = sphi 0, %s437
                %p436 = scmp.ge.s32.totalorder %s435, %s433
                %s440 = sphi 0, %s477
                %s441 = sphi %s413, %s480
                %s442 = sphi %s424, %s481
              $region51: #{tpu_custom_call.1} parent=47 // loop_header_branch
                %439 = sbr.rel (%p436) target = $region55
              $region52: #{tpu_custom_call.1} parent=47 // loop_body
                %v443 = vld [vmem:[%s441] sm:$0xff]
                %444 = vst [vmem:[%s442] sm:$0xff] %v443
                %v445 = vld [vmem:[%s441 + $0x8] sm:$0xff]
                %446 = vst [vmem:[%s442 + $0x8] sm:$0xff] %v445
                %v447 = vld [vmem:[%s441 + $0x10] sm:$0xff]
                %448 = vst [vmem:[%s442 + $0x10] sm:$0xff] %v447
                %v449 = vld [vmem:[%s441 + $0x18] sm:$0xff]
                %450 = vst [vmem:[%s442 + $0x18] sm:$0xff] %v449
                %v451 = vld [vmem:[%s441 + $0x20] sm:$0xff]
                %452 = vst [vmem:[%s442 + $0x20] sm:$0xff] %v451
                %v453 = vld [vmem:[%s441 + $0x28] sm:$0xff]
                %454 = vst [vmem:[%s442 + $0x28] sm:$0xff] %v453
                %v455 = vld [vmem:[%s441 + $0x30] sm:$0xff]
                %456 = vst [vmem:[%s442 + $0x30] sm:$0xff] %v455
                %v457 = vld [vmem:[%s441 + $0x38] sm:$0xff]
                %458 = vst [vmem:[%s442 + $0x38] sm:$0xff] %v457
                %v459 = vld [vmem:[%s441 + $0x40] sm:$0xff]
                %460 = vst [vmem:[%s442 + $0x40] sm:$0xff] %v459
                %v461 = vld [vmem:[%s441 + $0x48] sm:$0xff]
                %462 = vst [vmem:[%s442 + $0x48] sm:$0xff] %v461
                %v463 = vld [vmem:[%s441 + $0x50] sm:$0xff]
                %464 = vst [vmem:[%s442 + $0x50] sm:$0xff] %v463
                %v465 = vld [vmem:[%s441 + $0x58] sm:$0xff]
                %466 = vst [vmem:[%s442 + $0x58] sm:$0xff] %v465
                %v467 = vld [vmem:[%s441 + $0x60] sm:$0xff]
                %468 = vst [vmem:[%s442 + $0x60] sm:$0xff] %v467
                %v469 = vld [vmem:[%s441 + $0x68] sm:$0xff]
                %470 = vst [vmem:[%s442 + $0x68] sm:$0xff] %v469
                %v471 = vld [vmem:[%s441 + $0x70] sm:$0xff]
                %472 = vst [vmem:[%s442 + $0x70] sm:$0xff] %v471
                %v473 = vld [vmem:[%s441 + $0x78] sm:$0xff]
                %474 = vst [vmem:[%s442 + $0x78] sm:$0xff] %v473
                %s475 = sadd.s32 1, %s440
                %p476 = scmp.ge.s32.totalorder %s475, %s433
                %s477 = scalar_select %p476, 0, %s475
                %s478 = smul.u32 %s477, 128
                %s479 = smul.u32 %s477, 128
                %s480 = scalar_lea.vmem %s413, %s478 [#allocation2]
                %s481 = scalar_lea.vmem %s424, %s479
              $region53: #{tpu_custom_call.1} parent=47 // loop_footer
                %s437 = sadd.s32 %s435, 1
              $region54: #{tpu_custom_call.1} parent=47 // loop_footer_branch
                %434 = sbr.rel target = $region50
              $region55: #{tpu_custom_call.1} parent=47 // loop_exit
                _
              %s482 = sshrl.u32 %s420, 4
              %s483 = sand.u32 %s420, 15
              %s484 = smul.u32 %s482, 16
              %s485 = smul.u32 8, %s484
              %s486 = scalar_lea.vmem %s413, %s485 [#allocation2]
              %s487 = smul.u32 8, %s484
              %s488 = scalar_lea.vmem %s424, %s487
              // While loop
              $region56: #{tpu_custom_call.1} parent=47 // loop_pre_header
                _
              $region57: #{tpu_custom_call.1} parent=47 // loop_header
                %s490 = sphi 0, %s492
                %p491 = scmp.ge.s32.totalorder %s490, %s483
                %s495 = sphi 0, %s502
                %s496 = sphi %s486, %s505
                %s497 = sphi %s488, %s506
              $region58: #{tpu_custom_call.1} parent=47 // loop_header_branch
                %494 = sbr.rel (%p491) target = $region62
              $region59: #{tpu_custom_call.1} parent=47 // loop_body
                %v498 = vld [vmem:[%s496] sm:$0xff]
                %499 = vst [vmem:[%s497] sm:$0xff] %v498
                %s500 = sadd.s32 1, %s495
                %p501 = scmp.ge.s32.totalorder %s500, %s483
                %s502 = scalar_select %p501, 0, %s500
                %s503 = smul.u32 %s502, 8
                %s504 = smul.u32 %s502, 8
                %s505 = scalar_lea.vmem %s486, %s503 [#allocation2]
                %s506 = scalar_lea.vmem %s488, %s504
              $region60: #{tpu_custom_call.1} parent=47 // loop_footer
                %s492 = sadd.s32 %s490, 1
              $region61: #{tpu_custom_call.1} parent=47 // loop_footer_branch
                %489 = sbr.rel target = $region57
              $region62: #{tpu_custom_call.1} parent=47 // loop_exit
                _
            $region48: #{tpu_custom_call.1} parent=39 // pred_fallthru
              _
          $region40: #{tpu_custom_call.1} parent=35 // pred_fallthru
            _
          %585 = vnop
        $region36: #{tpu_custom_call.1} parent=31 // pred_fallthru
          _
      $region32: #{tpu_custom_call.1} parent=5 // pred_fallthru
        _
      %p586 = scmp.le.s32.totalorder 2, %s9
      // Predicated region
      $region85: #{tpu_custom_call.1} parent=5 // pred_check
        %p587 = pneg %p586
      $region86: #{tpu_custom_call.1} parent=5 // pred_check_branch
        %589 = sbr.rel (%p587) target = $region88
      $region87: #{tpu_custom_call.1} parent=5 // pred_region
        %s590 = ssub.s32 %s9, 2
        // Predicated region
        $region89: #{tpu_custom_call.1} parent=87 // pred_check
          %p591 = pneg %p106
        $region90: #{tpu_custom_call.1} parent=87 // pred_check_branch
          %593 = sbr.rel (%p591) target = $region92
        $region91: #{tpu_custom_call.1} parent=87 // pred_region
          %s594 = sand.u32 %s91, 1
          %s595 = sand.u32 %s91, 1
          %s596 = smul.addr %s595, 128
          %s597 = scalar_lea.vmem [#allocation2], %s596
        $region92: #{tpu_custom_call.1} parent=87 // pred_fallthru
          _
      $region88: #{tpu_custom_call.1} parent=5 // pred_fallthru
        _
    $region6: #{tpu_custom_call.1} parent=1 // loop_footer
      %s13 = sadd.s32 1, %s9
    $region7: #{tpu_custom_call.1} parent=1 // loop_footer_branch
      %8 = sbr.rel target = $region3
    $region8: #{tpu_custom_call.1} parent=1 // loop_exit
      _

</llo_original>
